<compile_context>
chip_gen: v7x
topology: tpu7x:2x2x1
jax: 0.10.0
libtpu: 0.0.40
codegen_flags: <defaults>
</compile_context>

<pallas_src>
import functools

import jax
import jax.numpy as jnp
from jax.experimental import pallas as pl
from jax.experimental.pallas import tpu as pltpu

HIDDEN = 256          # fc1 / fc2 width (matches the PyTorch module)
_BF16_SUBLANE = 16    # bf16 sublane packing granularity (segment / tile alignment)
_LANE = 128           # lane width


def _round_up(x, m):
    return ((x + m - 1) // m) * m


# ---------------------------------------------------------------------------
# Parameters
# ---------------------------------------------------------------------------
def init_actor_params(key, state_dim, action_dim, hidden=HIDDEN):
    """PyTorch nn.Linear-style init (uniform(+-1/sqrt(fan_in))).
    Weights stored pre-transposed as (in_features, out_features)."""
    keys = jax.random.split(key, 6)

    def linear(kw, kb, fan_in, fan_out):
        bound = 1.0 / jnp.sqrt(jnp.float32(fan_in))
        w = jax.random.uniform(kw, (fan_in, fan_out), jnp.float32, -bound, bound)
        b = jax.random.uniform(kb, (1, fan_out), jnp.float32, -bound, bound)
        return w, b

    w1, b1 = linear(keys[0], keys[1], state_dim, hidden)
    w2, b2 = linear(keys[2], keys[3], hidden, hidden)
    w3, b3 = linear(keys[4], keys[5], hidden, action_dim)
    return (w1, b1, w2, b2, w3, b3)


def pack_actor_params(params, dtype=jnp.bfloat16):
    """Coalesce w1,b1,w2,b2,w3,b3 into a single lane-dense (rows, 256) buffer.

    * one DMA + one resident VMEM block instead of 7 tiny transfers
    * w3/b3 live in the first `out_lanes` (=round_up(action_dim,128)) lanes and
      are zero-padded there; the kernel only ever reads those lanes, so fc3 and
      the output store are unmasked and only 128 lanes wide.
    * every segment starts on a 16-row boundary (bf16 sublane packing).
    """
    w1, b1, w2, b2, w3, b3 = params
    state_dim, hidden = w1.shape
    action_dim = w3.shape[1]
    sp = _round_up(state_dim, _BF16_SUBLANE)        # padded fc1 input dim
    out_lanes = _round_up(action_dim, _LANE)        # padded fc3 output lanes
    assert out_lanes <= hidden, "action_dim > hidden not supported by packed layout"

    off_w1 = 0
    off_b1 = sp
    off_w2 = off_b1 + _BF16_SUBLANE
    off_b2 = off_w2 + hidden
    off_w3 = off_b2 + _BF16_SUBLANE
    off_b3 = off_w3 + hidden
    total = off_b3 + _BF16_SUBLANE

    buf = jnp.zeros((total, hidden), jnp.float32)
    buf = buf.at[off_w1:off_w1 + state_dim, :].set(w1)
    buf = buf.at[off_b1, :].set(b1.reshape(-1))
    buf = buf.at[off_w2:off_w2 + hidden, :].set(w2)
    buf = buf.at[off_b2, :].set(b2.reshape(-1))
    buf = buf.at[off_w3:off_w3 + hidden, :action_dim].set(w3)
    buf = buf.at[off_b3, :action_dim].set(b3.reshape(-1))

    layout = dict(w1=off_w1, b1=off_b1, w2=off_w2, b2=off_b2,
                  w3=off_w3, b3=off_b3, sp=sp, total=total,
                  hidden=hidden, state_dim=state_dim, action_dim=action_dim,
                  out_lanes=out_lanes)
    return buf.astype(dtype), layout


# ---------------------------------------------------------------------------
# Kernel
# ---------------------------------------------------------------------------
def actor_kernel(x_ref, p_ref, o_ref, *, sp, hidden, out_lanes, off):
    f32 = jnp.float32
    bf16 = jnp.bfloat16

    x = x_ref[...]                                                # (TM, sp) bf16

    # fc1 + ReLU
    w1 = p_ref[pl.ds(off["w1"], sp), :]                           # (sp, 256) bf16
    b1 = p_ref[pl.ds(off["b1"], 1), :].astype(f32)                # (1, 256)
    h = jnp.maximum(jnp.dot(x, w1, preferred_element_type=f32) + b1, 0.0)

    # fc2 + ReLU
    w2 = p_ref[pl.ds(off["w2"], hidden), :]
    b2 = p_ref[pl.ds(off["b2"], 1), :].astype(f32)
    h = jnp.maximum(
        jnp.dot(h.astype(bf16), w2, preferred_element_type=f32) + b2, 0.0)

    # fc3 (trimmed to 128 output lanes) + Tanh
    w3 = p_ref[pl.ds(off["w3"], hidden), :out_lanes]              # (256, 128) bf16
    b3 = p_ref[pl.ds(off["b3"], 1), :out_lanes].astype(f32)       # (1, 128)
    y = jnp.dot(h.astype(bf16), w3, preferred_element_type=f32) + b3

    o_ref[...] = jnp.tanh(y).astype(o_ref.dtype)                  # lane-dense bf16 store


# ---------------------------------------------------------------------------
# Wrapper
# ---------------------------------------------------------------------------
def _choose_tiling(B, block_m):
    """Pick (bm, n_steps) so padding is < 16 rows/step and n_steps >= 2 when
    the batch is large enough (keeps both v7x TensorCores busy)."""
    n_steps = pl.cdiv(B, block_m)
    if B >= 2 * _BF16_SUBLANE:
        n_steps = max(n_steps, 2)
    n_steps = max(n_steps, 1)
    bm = _round_up(pl.cdiv(B, n_steps), _BF16_SUBLANE)
    return bm, n_steps


def actor_forward(state, packed_params, layout, *, block_m=512):
    """state: (B, state_dim) f32.  Returns (B, action_dim) f32.

    block_m default is a starting point, not a VMEM cap -- total pipelined
    VMEM footprint is ~1-2 MB, far below even v7x's 64 MiB; sweep
    {256, 512, 1024} per chip if this kernel is hot.
    """
    B, state_dim = state.shape
    assert state_dim == layout["state_dim"]
    sp = layout["sp"]
    hidden = layout["hidden"]
    total = layout["total"]
    action_dim = layout["action_dim"]
    out_lanes = layout["out_lanes"]

    bm, n_steps = _choose_tiling(B, block_m)
    bp = bm * n_steps

    # Pre-cast to bf16 (halves input DMA); pad only the few rows/cols needed.
    x = state.astype(jnp.bfloat16)
    if bp != B or sp != state_dim:
        xpad = jnp.zeros((bp, sp), jnp.bfloat16)
        xpad = xpad.at[:B, :state_dim].set(x)
    else:
        xpad = x

    kernel = functools.partial(actor_kernel, sp=sp, hidden=hidden,
                               out_lanes=out_lanes, off=layout)

    out = pl.pallas_call(
        kernel,
        out_shape=jax.ShapeDtypeStruct((bp, out_lanes), jnp.bfloat16),
        grid=(n_steps,),
        in_specs=[
            pl.BlockSpec((bm, sp), lambda i: (i, 0)),          # batch-tiled state
            # constant index_map -> fetched once, resident across all steps
            pl.BlockSpec((total, hidden), lambda i: (0, 0)),
        ],
        out_specs=pl.BlockSpec((bm, out_lanes), lambda i: (i, 0)),
        compiler_params=pltpu.CompilerParams(
            dimension_semantics=("parallel",),                 # megacore split on v7x
        ),
    )(xpad, packed_params)

    # TODO(synk): if the consumer tolerates a (B, 128) bf16 lane-padded result,
    # return `out[:B]` directly to skip this extra memory pass.
    return out[:B, :action_dim].astype(jnp.float32)


# ---------------------------------------------------------------------------
# References
# ---------------------------------------------------------------------------
def actor_reference_f32(state, params):
    w1, b1, w2, b2, w3, b3 = params
    x = jnp.maximum(state @ w1 + b1, 0.0)
    x = jnp.maximum(x @ w2 + b2, 0.0)
    return jnp.tanh(x @ w3 + b3)


def actor_reference_bf16(state, params):
    """Pure-JAX reference using the same bf16-weight / f32-accumulate / bf16-out
    recipe as the kernel."""
    w1, b1, w2, b2, w3, b3 = params
    bf = lambda a: a.astype(jnp.bfloat16)
    f32 = jnp.float32
    x = bf(state)
    h = jnp.maximum(
        jnp.dot(x, bf(w1), preferred_element_type=f32) + bf(b1).astype(f32), 0.0)
    h = jnp.maximum(
        jnp.dot(bf(h), bf(w2), preferred_element_type=f32) + bf(b2).astype(f32), 0.0)
    y = jnp.dot(bf(h), bf(w3), preferred_element_type=f32) + bf(b3).astype(f32)
    return jnp.tanh(y).astype(jnp.bfloat16).astype(jnp.float32)


if __name__ == "__main__":
    B, STATE_DIM, ACTION_DIM = 64, 16, 4

    key = jax.random.PRNGKey(0)
    k_state, k_params = jax.random.split(key)

    state = jax.random.normal(k_state, (B, STATE_DIM), dtype=jnp.float32)
    params = init_actor_params(k_params, STATE_DIM, ACTION_DIM)
    packed, layout = pack_actor_params(params)

    # At B=64 the tiling chooser produces a 2-step grid (bm=32), exercising the
    # pipelined / parallel path without any batch padding.
    out = actor_forward(state, packed, layout)
    out = jax.block_until_ready(out)

    assert out.shape == (B, ACTION_DIM)

    ref_match = actor_reference_bf16(state, params)   # same numerics as kernel
    ref_f32 = actor_reference_f32(state, params)      # module semantics in f32
    assert jnp.allclose(out, ref_match, atol=1e-2, rtol=0.0), \
        float(jnp.max(jnp.abs(out - ref_match)))
    assert jnp.allclose(out, ref_f32, atol=5e-2, rtol=0.0), \
        float(jnp.max(jnp.abs(out - ref_f32)))

    print("KERNEL_OK")
</pallas_src>

<mosaic_0001>
module attributes {stable_mosaic.version = 11 : i64} {
  func.func @actor_kernel(%arg0: i32, %arg1: memref<32x16xbf16, #tpu.memory_space<vmem>>, %arg2: memref<576x256xbf16, #tpu.memory_space<vmem>>, %arg3: memref<32x128xbf16, #tpu.memory_space<vmem>>) attributes {dimension_semantics = [#tpu.dimension_semantics<parallel>], iteration_bounds = array<i64: 2>, scalar_prefetch = 0 : i64, scratch_operands = 0 : i64, tpu.core_type = #tpu.core_type<tc>, window_params = [{transform_indices = @transform_0, window_bounds = array<i64: 32, 16>}, {pipeline_mode = #tpu.pipeline_mode<synchronous>, transform_indices = @transform_1, window_bounds = array<i64: 576, 256>}, {transform_indices = @transform_2, window_bounds = array<i64: 32, 128>}]} {
    %c0 = arith.constant 0 : index
    %c0_0 = arith.constant 0 : index
    %0 = vector.load %arg1[%c0, %c0_0] : memref<32x16xbf16, #tpu.memory_space<vmem>>, vector<32x16xbf16>
    %c0_1 = arith.constant 0 : index
    %c0_2 = arith.constant 0 : index
    %1 = vector.load %arg2[%c0_1, %c0_2] : memref<576x256xbf16, #tpu.memory_space<vmem>>, vector<16x256xbf16>
    %c16 = arith.constant 16 : index
    %c0_3 = arith.constant 0 : index
    %2 = vector.load %arg2[%c16, %c0_3] : memref<576x256xbf16, #tpu.memory_space<vmem>>, vector<1x256xbf16>
    %3 = arith.extf %2 : vector<1x256xbf16> to vector<1x256xf32>
    %cst = arith.constant dense<0.000000e+00> : vector<32x256xf32>
    %4 = tpu.matmul %0, %1, %cst {dimension_numbers = #tpu.dot_dimension_numbers<[1], [0], [0], [1], [0, 0, 1, 1], [], []>} : vector<32x16xbf16>, vector<16x256xbf16>, vector<32x256xf32> -> vector<32x256xf32>
    %5 = vector.broadcast %3 : vector<1x256xf32> to vector<32x256xf32>
    %6 = arith.addf %4, %5 : vector<32x256xf32>
    %cst_4 = arith.constant 0.000000e+00 : f32
    %7 = vector.broadcast %cst_4 : f32 to vector<32x256xf32>
    %8 = arith.maximumf %6, %7 : vector<32x256xf32>
    %c32 = arith.constant 32 : index
    %c0_5 = arith.constant 0 : index
    %9 = vector.load %arg2[%c32, %c0_5] : memref<576x256xbf16, #tpu.memory_space<vmem>>, vector<256x256xbf16>
    %c288 = arith.constant 288 : index
    %c0_6 = arith.constant 0 : index
    %10 = vector.load %arg2[%c288, %c0_6] : memref<576x256xbf16, #tpu.memory_space<vmem>>, vector<1x256xbf16>
    %11 = arith.extf %10 : vector<1x256xbf16> to vector<1x256xf32>
    %12 = arith.truncf %8 : vector<32x256xf32> to vector<32x256xbf16>
    %cst_7 = arith.constant dense<0.000000e+00> : vector<32x256xf32>
    %13 = tpu.matmul %12, %9, %cst_7 {dimension_numbers = #tpu.dot_dimension_numbers<[1], [0], [0], [1], [0, 0, 1, 1], [], []>} : vector<32x256xbf16>, vector<256x256xbf16>, vector<32x256xf32> -> vector<32x256xf32>
    %14 = vector.broadcast %11 : vector<1x256xf32> to vector<32x256xf32>
    %15 = arith.addf %13, %14 : vector<32x256xf32>
    %cst_8 = arith.constant 0.000000e+00 : f32
    %16 = vector.broadcast %cst_8 : f32 to vector<32x256xf32>
    %17 = arith.maximumf %15, %16 : vector<32x256xf32>
    %c304 = arith.constant 304 : index
    %c0_9 = arith.constant 0 : index
    %18 = vector.load %arg2[%c304, %c0_9] : memref<576x256xbf16, #tpu.memory_space<vmem>>, vector<256x128xbf16>
    %c560 = arith.constant 560 : index
    %c0_10 = arith.constant 0 : index
    %19 = vector.load %arg2[%c560, %c0_10] : memref<576x256xbf16, #tpu.memory_space<vmem>>, vector<1x128xbf16>
    %20 = arith.extf %19 : vector<1x128xbf16> to vector<1x128xf32>
    %21 = arith.truncf %17 : vector<32x256xf32> to vector<32x256xbf16>
    %cst_11 = arith.constant dense<0.000000e+00> : vector<32x128xf32>
    %22 = tpu.matmul %21, %18, %cst_11 {dimension_numbers = #tpu.dot_dimension_numbers<[1], [0], [0], [1], [0, 0, 1, 1], [], []>} : vector<32x256xbf16>, vector<256x128xbf16>, vector<32x128xf32> -> vector<32x128xf32>
    %23 = vector.broadcast %20 : vector<1x128xf32> to vector<32x128xf32>
    %24 = arith.addf %22, %23 : vector<32x128xf32>
    %25 = math.tanh %24 : vector<32x128xf32>
    %26 = arith.truncf %25 : vector<32x128xf32> to vector<32x128xbf16>
    %c0_12 = arith.constant 0 : index
    %c0_13 = arith.constant 0 : index
    %27 = vector.load %arg3[%c0_12, %c0_13] : memref<32x128xbf16, #tpu.memory_space<vmem>>, vector<32x128xbf16>
    tpu.vector_store %arg3[%c0_12, %c0_13], %26 {strides = array<i32>} : memref<32x128xbf16, #tpu.memory_space<vmem>>, vector<32x128xbf16>,
    return
  }
  func.func @transform_0(%arg0: i32) -> (i32, i32) {
    %c0_i32 = arith.constant 0 : i32
    %c0_i32_0 = arith.constant 0 : i32
    return %arg0, %c0_i32 : i32, i32
  }
  func.func @transform_1(%arg0: i32) -> (i32, i32) {
    %c0_i32 = arith.constant 0 : i32
    %c0_i32_0 = arith.constant 0 : i32
    %c0_i32_1 = arith.constant 0 : i32
    return %c0_i32, %c0_i32_0 : i32, i32
  }
  func.func @transform_2(%arg0: i32) -> (i32, i32) {
    %c0_i32 = arith.constant 0 : i32
    %c0_i32_0 = arith.constant 0 : i32
    return %arg0, %c0_i32 : i32, i32
  }
}

</mosaic_0001>

<llo_original>
// kernel: tpu_custom_call.1
$region0: #{tpu_custom_call.1}
  #allocation0 [shape = 'u32[]', space=smem, size = 0x4, offset = 0x4, fixed_abs, tag = 'smem constant byte address 0x4 - core index']
  #allocation1 [shape = 'u32[144,128]{1,0:T(1,128)}', space=vmem, size = 0x12000, scoped, tag = 'internal scratch']
  %s0 = inlined_call_operand.vmem [shape: bf16[64,16], index: 0, kind: input, shape index: {}]
  %s1 = inlined_call_operand.hbm [shape: bf16[576,256], index: 1, kind: input, shape index: {}]
  %s2 = inlined_call_operand.hbm [shape: bf16[64,128], index: 2, kind: output, shape index: {}]
  %s3 = sld [smem:[#allocation0]]
  $region45: #{tpu_custom_call.1} parent=0
    _
  %s5 = ssub.s32 1, %s3
  %s6 = scalar_select 0, %s5, %s3
  $region1: #{tpu_custom_call.1} parent=0
    #allocation2 [shape = 'u8[294912]{0}', space=vmem, size = 0x48000, scoped, tag = 'input window, operand 1, single buffered']
    #allocation3 [shape = 's32[2]{0}', space=sflag, size = 0x8, scoped, tag = 'scoped memory for tpu_custom_call.1']
    #allocation4 [shape = 's32[2]{0}', space=sflag, size = 0x8, scoped, tag = 'scoped memory for tpu_custom_call.1']
    #allocation5 [shape = 'u8[16384]{0}', space=vmem, size = 0x4000, scoped, tag = 'output window, operand 0']
    %7 = vsyncpa [#allocation3], 0
    %8 = vsyncpa [#allocation4], 0
    %s9 = scalar_lea.sflag [#allocation4], 1
    %10 = vsyncpa %s9, 0
    loop: start=0, step=1, limit=4
    $region2: #{tpu_custom_call.1} parent=1 // loop_pre_header
      _
    $region3: #{tpu_custom_call.1} parent=1 // loop_header
      %s12 = sphi 0, %s16
      %p13 = scmp.ge.s32.totalorder %s12, 4
      %s22 = sphi 0, %s24
      %s25 = sphi 0, %s22
      %s26 = sphi 0, %s25
      %s42 = sphi 0, %s26
      %s46 = sphi 0, %s46
      %s48 = sphi 0, %s46
      %s49 = sphi 0, %s48
      %s63 = sphi 0, %s49
      %s69 = sphi 0, %s71
      %s72 = sphi 0, %s69
      %s73 = sphi 0, %s72
      %s89 = sphi 0, %s73
    $region4: #{tpu_custom_call.1} parent=1 // loop_header_branch
      %15 = sbr.rel (%p13) target = $region8
    $region5: #{tpu_custom_call.1} parent=1 // loop_body
      %s17 = ssub.s32 %s12, 1
      %s18 = ssub.s32 %s12, 2
      %s19 = sadd.s32 %s12, 1
      %s20 = ssub.s32 %s12, %s19
      %p21 = scmp.eq.s32.totalorder %s20, 0
      %s23 = sadd.s32 %s22, 1
      %s24 = scalar_select %p21, %s22, %s23
      %p27 = pneg %p21
      %p28 = scmp.eq.s32.totalorder %s12, 1
      %p29 = por %p27, %p28
      %p30 = scmp.ne.s32.totalorder %s22, %s25
      %p31 = scmp.eq.s32.totalorder %s12, 0
      %p32 = por %p30, %p31
      %p33 = scmp.ne.s32.totalorder %s22, %s25
      %p34 = scmp.eq.s32.totalorder %s17, 1
      %p35 = por %p33, %p34
      %p36 = scmp.ne.s32.totalorder %s25, %s26
      %p37 = scmp.eq.s32.totalorder %s17, 0
      %p38 = por %p36, %p37
      %p39 = scmp.ne.s32.totalorder %s25, %s26
      %p40 = scmp.eq.s32.totalorder %s18, 1
      %p41 = por %p39, %p40
      %p43 = scmp.ne.s32.totalorder %s26, %s42
      %p44 = scmp.eq.s32.totalorder %s18, 0
      %p45 = por %p43, %p44
      %s47 = sadd.s32 %s46, 1
      %p50 = scmp.eq.s32.totalorder %s12, 1
      %p51 = scmp.ne.s32.totalorder %s46, %s48
      %p52 = scmp.eq.s32.totalorder %s12, 0
      %p53 = por %p51, %p52
      %p54 = scmp.ne.s32.totalorder %s46, %s48
      %p55 = scmp.eq.s32.totalorder %s17, 1
      %p56 = por %p54, %p55
      %p57 = scmp.ne.s32.totalorder %s48, %s49
      %p58 = scmp.eq.s32.totalorder %s17, 0
      %p59 = por %p57, %p58
      %p60 = scmp.ne.s32.totalorder %s48, %s49
      %p61 = scmp.eq.s32.totalorder %s18, 1
      %p62 = por %p60, %p61
      %p64 = scmp.ne.s32.totalorder %s49, %s63
      %p65 = scmp.eq.s32.totalorder %s18, 0
      %p66 = por %p64, %p65
      %s67 = ssub.s32 %s12, %s19
      %p68 = scmp.eq.s32.totalorder %s67, 0
      %s70 = sadd.s32 %s69, 1
      %s71 = scalar_select %p68, %s69, %s70
      %p74 = pneg %p68
      %p75 = scmp.eq.s32.totalorder %s12, 1
      %p76 = por %p74, %p75
      %p77 = scmp.ne.s32.totalorder %s69, %s72
      %p78 = scmp.eq.s32.totalorder %s12, 0
      %p79 = por %p77, %p78
      %p80 = scmp.ne.s32.totalorder %s69, %s72
      %p81 = scmp.eq.s32.totalorder %s17, 1
      %p82 = por %p80, %p81
      %p83 = scmp.ne.s32.totalorder %s72, %s73
      %p84 = scmp.eq.s32.totalorder %s17, 0
      %p85 = por %p83, %p84
      %p86 = scmp.ne.s32.totalorder %s72, %s73
      %p87 = scmp.eq.s32.totalorder %s18, 1
      %p88 = por %p86, %p87
      %p90 = scmp.ne.s32.totalorder %s73, %s89
      %p91 = scmp.eq.s32.totalorder %s18, 0
      %p92 = por %p90, %p91
      %p93 = scmp.le.s32.totalorder 1, %s12
      %p94 = scmp.lt.s32.totalorder %s12, 3
      %p95 = pnand %p93, %p94
      %p96 = pneg %p95
      // Predicated region
      $region9: #{tpu_custom_call.1} parent=5 // pred_check
        _
      $region10: #{tpu_custom_call.1} parent=5 // pred_check_branch
        %98 = sbr.rel (%p95) target = $region12
      $region11: #{tpu_custom_call.1} parent=5 // pred_region
        %s99 = ssub.s32 %s12, 1
        // Predicated region
        $region13: #{tpu_custom_call.1} parent=11 // pred_check
          %p100 = pneg %p59
        $region14: #{tpu_custom_call.1} parent=11 // pred_check_branch
          %102 = sbr.rel (%p100) target = $region16
        $region15: #{tpu_custom_call.1} parent=11 // pred_region
          %s104 = ssub.s32 9216, 9216
          %105 = vsyncadd [#allocation3], %s104
          %s106 = sshll.u32 [#allocation2], 4
          %s107 = int_to_ptr.vmem [resolvable:$true] %s106
          %112 = dma.hbm_to_vmem [thread:$0]  %s1, 9216, %s107, [#allocation3], 128, 128, 8
        $region16: #{tpu_custom_call.1} parent=11 // pred_fallthru
          _
      $region12: #{tpu_custom_call.1} parent=5 // pred_fallthru
        _
      %p113 = scmp.lt.s32.totalorder %s12, 2
      // Predicated region
      $region17: #{tpu_custom_call.1} parent=5 // pred_check
        %p114 = pneg %p113
      $region18: #{tpu_custom_call.1} parent=5 // pred_check_branch
        %116 = sbr.rel (%p114) target = $region20
      $region19: #{tpu_custom_call.1} parent=5 // pred_region
        // Predicated region
        $region21: #{tpu_custom_call.1} parent=19 // pred_check
          %p117 = pneg %p32
        $region22: #{tpu_custom_call.1} parent=19 // pred_check_branch
          %119 = sbr.rel (%p117) target = $region24
        $region23: #{tpu_custom_call.1} parent=19 // pred_region
          %s120 = smul.u32 4, %s12
          %p121 = scmp.lt.s32.totalorder %s120, 7
          %s122 = scalar_select %p121, %s120, 7
          %s123 = smul.addr %s122, 4
          %s124 = scalar_lea.vmem %s0, %s123
          %s125 = smul.u32 4, %s12
        $region24: #{tpu_custom_call.1} parent=19 // pred_fallthru
          _
      $region20: #{tpu_custom_call.1} parent=5 // pred_fallthru
        _
      %p126 = scmp.le.s32.totalorder 1, %s12
      %p127 = scmp.lt.s32.totalorder %s12, 3
      %p128 = pnand %p126, %p127
      %p129 = pneg %p128
      // Predicated region
      $region25: #{tpu_custom_call.1} parent=5 // pred_check
        _
      $region26: #{tpu_custom_call.1} parent=5 // pred_check_branch
        %131 = sbr.rel (%p128) target = $region28
      $region27: #{tpu_custom_call.1} parent=5 // pred_region
        %s132 = ssub.s32 %s12, 1
        // Predicated region
        $region29: #{tpu_custom_call.1} parent=27 // pred_check
          %p133 = pneg %p59
        $region30: #{tpu_custom_call.1} parent=27 // pred_check_branch
          %135 = sbr.rel (%p133) target = $region32
        $region31: #{tpu_custom_call.1} parent=27 // pred_region
          %136 = dma.done [#allocation3], 9216
        $region32: #{tpu_custom_call.1} parent=27 // pred_fallthru
          _
        %s137 = smul.u32 4, %s17
        %p138 = scmp.lt.s32.totalorder %s137, 7
        %s139 = scalar_select %p138, %s137, 7
        %s140 = smul.addr %s139, 4
        %s141 = scalar_lea.vmem %s0, %s140
        %p142 = pneg %p38
        %p143 = pneg %p35
        %p144 = pneg %p59
        %p145 = pneg %p56
        %p146 = pneg %p85
        %p147 = pneg %p82
        %s148 = sand.u32 %s72, 1
        %s149 = scalar_lea.sflag [#allocation4], %s148
        %s150 = sand.u32 %s72, 1
        %s151 = smul.addr %s150, 16
        %s152 = scalar_lea.vmem [#allocation5], %s151
        %s153 = smul.u32 4, %s17
        %p154 = scmp.lt.s32.totalorder %s153, 7
        %s155 = scalar_select %p154, %s153, 7
        %s156 = smul.addr %s155, 4
        %s157 = scalar_lea.vmem %s0, %s156
        %s158 = smul.u32 4, %s17
        %s159 = smul.u32 4, %s17
        %v161 = vld [vmem:[%s157] sm:$0xf]
        %v162 = vld [vmem:[%s157 + $0x4] sm:$0xf]
        %v163 = vld [vmem:[%s157 + $0x8] sm:$0xf]
        %v164 = vld [vmem:[%s157 + $0xc] sm:$0xf]
        %v165 = vld [vmem:[#allocation2] sm:$0xff]
        %v166 = vld [vmem:[#allocation2 + $0x8] sm:$0xff]
        %v167 = vld [vmem:[#allocation2 + $0x10] sm:$0x11]
        %v168 = vunpack.c.l.bf16 %v167
        %v169 = vunpack.c.h.bf16 %v167
        %v170 = vlaneseq
        %v171 = vshrl.u32 %v170, 7
        %v172 = vsub.s32 0, %v171
        %v173 = vrot.slane %v168, %v172
        %v174 = vlaneseq
        %v175 = vshrl.u32 %v174, 7
        %v176 = vsub.s32 0, %v175
        %v177 = vrot.slane %v169, %v176
        %v182 = vunpack.c.l.b16 %v161
        %v183 = vunpack.c.l.b16 %v162
        %v184 = vunpack.c.l.b16 %v163
        %v185 = vunpack.c.l.b16 %v164
        %v186 = vpack.c.b16 %v183, %v182
        %v187 = vpack.c.b16 %v185, %v184
        %v190 = vunpack.c.l.b16 %v165
        %v191 = vunpack.c.h.b16 %v165
        %v192 = vunpack.c.l.b16 %v166
        %v193 = vunpack.c.h.b16 %v166
        %v194 = vpack.c.b16 %v192, %v190
        %v195 = vpack.c.b16 %v193, %v191
        %vm198 = vcmask 130048
        %v200 = vsel %vm198, %v186, 0
        %v203 = vsel %vm198, %v187, 0
        %205 = vmatprep.subr.bf16.mxu0 %v195
        %206 = vmatpush1.bf16.msra.mxu0 %v194
        %207 = vmatprep.subr.bf16.mxu0 0
        %208 = vmatpush1.bf16.msra.mxu0 0
        %209 = vmatprep.subr.bf16.mxu0 0
        %210 = vmatpush1.bf16.msra.mxu0 0
        %211 = vmatprep.subr.bf16.mxu0 0
        %212 = vmatpush1.bf16.msra.mxu0 0
        %213 = vmatprep.subr.bf16.mxu0 0
        %214 = vmatpush1.bf16.msra.mxu0 0
        %215 = vmatprep.subr.bf16.mxu0 0
        %216 = vmatpush1.bf16.msra.mxu0 0
        %217 = vmatprep.subr.bf16.mxu0 0
        %218 = vmatpush1.bf16.msra.mxu0 0
        %219 = vmatprep.subr.bf16.mxu0 0
        %220 = vmatpush1.bf16.msra.mxu0 0
        %221 = vmatprep.subr.bf16.mxu0 0
        %222 = vmatpush1.bf16.msra.mxu0 0
        %223 = vmatprep.subr.bf16.mxu0 0
        %224 = vmatpush1.bf16.msra.mxu0 0
        %225 = vmatprep.subr.bf16.mxu0 0
        %226 = vmatpush1.bf16.msra.mxu0 0
        %227 = vmatprep.subr.bf16.mxu0 0
        %228 = vmatpush1.bf16.msra.mxu0 0
        %229 = vmatprep.subr.bf16.mxu0 0
        %230 = vmatpush1.bf16.msra.mxu0 0
        %231 = vmatprep.subr.bf16.mxu0 0
        %232 = vmatpush1.bf16.msra.mxu0 0
        %233 = vmatprep.subr.bf16.mxu0 0
        %234 = vmatpush1.bf16.msra.mxu0 0
        %235 = vmatprep.subr.bf16.mxu0 0
        %236 = vmatpush1.bf16.msra.mxu0 0
        %237 = vmatprep.mubr.bf16.mxu0 0
        %238 = vmatmul.mubr.bf16.gmra.mrb[0].mxu0 %v200
        %v239 = vpop.f32.mrb[0].mxu0
        %v240 = vadd.f32 %v173, %v239
        %v241 = vpop.f32.mrb[0].mxu0
        %v242 = vadd.f32 %v177, %v241
        %v243 = vpop.f32.mrb[0].mxu0
        %v244 = vadd.f32 %v173, %v243
        %v245 = vpop.f32.mrb[0].mxu0
        %v246 = vadd.f32 %v177, %v245
        %247 = vmatprep.mubr.bf16.mxu0 0
        %248 = vmatmul.mubr.bf16.gmra.mrb[0].mxu0 %v203
        %v249 = vpop.f32.mrb[0].mxu0
        %v250 = vadd.f32 %v173, %v249
        %v251 = vpop.f32.mrb[0].mxu0
        %v252 = vadd.f32 %v177, %v251
        %v253 = vpop.f32.mrb[0].mxu0
        %v254 = vadd.f32 %v173, %v253
        %v255 = vpop.f32.mrb[0].mxu0
        %v256 = vadd.f32 %v177, %v255
        %257 = vdwg.mxu0
        %v258 = vmax.f32 %v240, 0.0
        %v259 = vmax.f32 %v242, 0.0
        %v260 = vmax.f32 %v244, 0.0
        %v261 = vmax.f32 %v246, 0.0
        %v262 = vmax.f32 %v250, 0.0
        %v263 = vmax.f32 %v252, 0.0
        %v264 = vmax.f32 %v254, 0.0
        %v265 = vmax.f32 %v256, 0.0
        %v266 = vld [vmem:[#allocation2 + $0x20] sm:$0xff]
        %v267 = vld [vmem:[#allocation2 + $0x28] sm:$0xff]
        %v268 = vld [vmem:[#allocation2 + $0x30] sm:$0xff]
        %v269 = vld [vmem:[#allocation2 + $0x38] sm:$0xff]
        %v270 = vld [vmem:[#allocation2 + $0x40] sm:$0xff]
        %v271 = vld [vmem:[#allocation2 + $0x48] sm:$0xff]
        %v272 = vld [vmem:[#allocation2 + $0x50] sm:$0xff]
        %v273 = vld [vmem:[#allocation2 + $0x58] sm:$0xff]
        %v274 = vld [vmem:[#allocation2 + $0x60] sm:$0xff]
        %v275 = vld [vmem:[#allocation2 + $0x68] sm:$0xff]
        %v276 = vld [vmem:[#allocation2 + $0x70] sm:$0xff]
        %v277 = vld [vmem:[#allocation2 + $0x78] sm:$0xff]
        %v278 = vld [vmem:[#allocation2 + $0x80] sm:$0xff]
        %v279 = vld [vmem:[#allocation2 + $0x88] sm:$0xff]
        %v280 = vld [vmem:[#allocation2 + $0x90] sm:$0xff]
        %v281 = vld [vmem:[#allocation2 + $0x98] sm:$0xff]
        %v282 = vld [vmem:[#allocation2 + $0xa0] sm:$0xff]
        %v283 = vld [vmem:[#allocation2 + $0xa8] sm:$0xff]
        %v284 = vld [vmem:[#allocation2 + $0xb0] sm:$0xff]
        %v285 = vld [vmem:[#allocation2 + $0xb8] sm:$0xff]
        %v286 = vld [vmem:[#allocation2 + $0xc0] sm:$0xff]
        %v287 = vld [vmem:[#allocation2 + $0xc8] sm:$0xff]
        %v288 = vld [vmem:[#allocation2 + $0xd0] sm:$0xff]
        %v289 = vld [vmem:[#allocation2 + $0xd8] sm:$0xff]
        %v290 = vld [vmem:[#allocation2 + $0xe0] sm:$0xff]
        %v291 = vld [vmem:[#allocation2 + $0xe8] sm:$0xff]
        %v292 = vld [vmem:[#allocation2 + $0xf0] sm:$0xff]
        %v293 = vld [vmem:[#allocation2 + $0xf8] sm:$0xff]
        %v294 = vld [vmem:[#allocation2 + $0x100] sm:$0xff]
        %v295 = vld [vmem:[#allocation2 + $0x108] sm:$0xff]
        %v296 = vld [vmem:[#allocation2 + $0x110] sm:$0xff]
        %v297 = vld [vmem:[#allocation2 + $0x118] sm:$0xff]
        %v298 = vld [vmem:[#allocation2 + $0x120] sm:$0x11]
        %v299 = vunpack.c.l.bf16 %v298
        %v300 = vunpack.c.h.bf16 %v298
        %v301 = vpack.c.bf16 %v260, %v258
        %v302 = vpack.c.bf16 %v261, %v259
        %v303 = vpack.c.bf16 %v264, %v262
        %v304 = vpack.c.bf16 %v265, %v263
        %v305 = vlaneseq
        %v306 = vshrl.u32 %v305, 7
        %v307 = vsub.s32 0, %v306
        %v308 = vrot.slane %v299, %v307
        %v309 = vlaneseq
        %v310 = vshrl.u32 %v309, 7
        %v311 = vsub.s32 0, %v310
        %v312 = vrot.slane %v300, %v311
        %v345 = vunpack.c.l.b16 %v266
        %v346 = vunpack.c.h.b16 %v266
        %v347 = vunpack.c.l.b16 %v267
        %v348 = vunpack.c.h.b16 %v267
        %v349 = vunpack.c.l.b16 %v268
        %v350 = vunpack.c.h.b16 %v268
        %v351 = vunpack.c.l.b16 %v269
        %v352 = vunpack.c.h.b16 %v269
        %v353 = vunpack.c.l.b16 %v270
        %v354 = vunpack.c.h.b16 %v270
        %v355 = vunpack.c.l.b16 %v271
        %v356 = vunpack.c.h.b16 %v271
        %v357 = vunpack.c.l.b16 %v272
        %v358 = vunpack.c.h.b16 %v272
        %v359 = vunpack.c.l.b16 %v273
        %v360 = vunpack.c.h.b16 %v273
        %v361 = vunpack.c.l.b16 %v274
        %v362 = vunpack.c.h.b16 %v274
        %v363 = vunpack.c.l.b16 %v275
        %v364 = vunpack.c.h.b16 %v275
        %v365 = vunpack.c.l.b16 %v276
        %v366 = vunpack.c.h.b16 %v276
        %v367 = vunpack.c.l.b16 %v277
        %v368 = vunpack.c.h.b16 %v277
        %v369 = vunpack.c.l.b16 %v278
        %v370 = vunpack.c.h.b16 %v278
        %v371 = vunpack.c.l.b16 %v279
        %v372 = vunpack.c.h.b16 %v279
        %v373 = vunpack.c.l.b16 %v280
        %v374 = vunpack.c.h.b16 %v280
        %v375 = vunpack.c.l.b16 %v281
        %v376 = vunpack.c.h.b16 %v281
        %v377 = vunpack.c.l.b16 %v282
        %v378 = vunpack.c.h.b16 %v282
        %v379 = vunpack.c.l.b16 %v283
        %v380 = vunpack.c.h.b16 %v283
        %v381 = vunpack.c.l.b16 %v284
        %v382 = vunpack.c.h.b16 %v284
        %v383 = vunpack.c.l.b16 %v285
        %v384 = vunpack.c.h.b16 %v285
        %v385 = vunpack.c.l.b16 %v286
        %v386 = vunpack.c.h.b16 %v286
        %v387 = vunpack.c.l.b16 %v287
        %v388 = vunpack.c.h.b16 %v287
        %v389 = vunpack.c.l.b16 %v288
        %v390 = vunpack.c.h.b16 %v288
        %v391 = vunpack.c.l.b16 %v289
        %v392 = vunpack.c.h.b16 %v289
        %v393 = vunpack.c.l.b16 %v290
        %v394 = vunpack.c.h.b16 %v290
        %v395 = vunpack.c.l.b16 %v291
        %v396 = vunpack.c.h.b16 %v291
        %v397 = vunpack.c.l.b16 %v292
        %v398 = vunpack.c.h.b16 %v292
        %v399 = vunpack.c.l.b16 %v293
        %v400 = vunpack.c.h.b16 %v293
        %v401 = vunpack.c.l.b16 %v294
        %v402 = vunpack.c.h.b16 %v294
        %v403 = vunpack.c.l.b16 %v295
        %v404 = vunpack.c.h.b16 %v295
        %v405 = vunpack.c.l.b16 %v296
        %v406 = vunpack.c.h.b16 %v296
        %v407 = vunpack.c.l.b16 %v297
        %v408 = vunpack.c.h.b16 %v297
        %v409 = vpack.c.b16 %v347, %v345
        %v410 = vpack.c.b16 %v348, %v346
        %v411 = vpack.c.b16 %v351, %v349
        %v412 = vpack.c.b16 %v352, %v350
        %v413 = vpack.c.b16 %v355, %v353
        %v414 = vpack.c.b16 %v356, %v354
        %v415 = vpack.c.b16 %v359, %v357
        %v416 = vpack.c.b16 %v360, %v358
        %v417 = vpack.c.b16 %v363, %v361
        %v418 = vpack.c.b16 %v364, %v362
        %v419 = vpack.c.b16 %v367, %v365
        %v420 = vpack.c.b16 %v368, %v366
        %v421 = vpack.c.b16 %v371, %v369
        %v422 = vpack.c.b16 %v372, %v370
        %v423 = vpack.c.b16 %v375, %v373
        %v424 = vpack.c.b16 %v376, %v374
        %v425 = vpack.c.b16 %v379, %v377
        %v426 = vpack.c.b16 %v380, %v378
        %v427 = vpack.c.b16 %v383, %v381
        %v428 = vpack.c.b16 %v384, %v382
        %v429 = vpack.c.b16 %v387, %v385
        %v430 = vpack.c.b16 %v388, %v386
        %v431 = vpack.c.b16 %v391, %v389
        %v432 = vpack.c.b16 %v392, %v390
        %v433 = vpack.c.b16 %v395, %v393
        %v434 = vpack.c.b16 %v396, %v394
        %v435 = vpack.c.b16 %v399, %v397
        %v436 = vpack.c.b16 %v400, %v398
        %v437 = vpack.c.b16 %v403, %v401
        %v438 = vpack.c.b16 %v404, %v402
        %v439 = vpack.c.b16 %v407, %v405
        %v440 = vpack.c.b16 %v408, %v406
        %473 = vmatprep.subr.bf16.mxu0 %v410
        %474 = vmatpush1.bf16.msra.mxu0 %v409
        %475 = vmatprep.subr.bf16.mxu0 %v412
        %476 = vmatpush1.bf16.msra.mxu0 %v411
        %477 = vmatprep.subr.bf16.mxu0 %v414
        %478 = vmatpush1.bf16.msra.mxu0 %v413
        %479 = vmatprep.subr.bf16.mxu0 %v416
        %480 = vmatpush1.bf16.msra.mxu0 %v415
        %481 = vmatprep.subr.bf16.mxu0 %v418
        %482 = vmatpush1.bf16.msra.mxu0 %v417
        %483 = vmatprep.subr.bf16.mxu0 %v420
        %484 = vmatpush1.bf16.msra.mxu0 %v419
        %485 = vmatprep.subr.bf16.mxu0 %v422
        %486 = vmatpush1.bf16.msra.mxu0 %v421
        %487 = vmatprep.subr.bf16.mxu0 %v424
        %488 = vmatpush1.bf16.msra.mxu0 %v423
        %489 = vmatprep.subr.bf16.mxu0 %v426
        %490 = vmatpush1.bf16.msra.mxu0 %v425
        %491 = vmatprep.subr.bf16.mxu0 %v428
        %492 = vmatpush1.bf16.msra.mxu0 %v427
        %493 = vmatprep.subr.bf16.mxu0 %v430
        %494 = vmatpush1.bf16.msra.mxu0 %v429
        %495 = vmatprep.subr.bf16.mxu0 %v432
        %496 = vmatpush1.bf16.msra.mxu0 %v431
        %497 = vmatprep.subr.bf16.mxu0 %v434
        %498 = vmatpush1.bf16.msra.mxu0 %v433
        %499 = vmatprep.subr.bf16.mxu0 %v436
        %500 = vmatpush1.bf16.msra.mxu0 %v435
        %501 = vmatprep.subr.bf16.mxu0 %v438
        %502 = vmatpush1.bf16.msra.mxu0 %v437
        %503 = vmatprep.subr.bf16.mxu0 %v440
        %504 = vmatpush1.bf16.msra.mxu0 %v439
        %505 = vmatprep.mubr.bf16.mxu0 %v302
        %506 = vmatmul.mubr.bf16.gmra.mrb[0].mxu0 %v301
        %v507 = vpop.f32.mrb[0].mxu0
        %v508 = vadd.f32 %v308, %v507
        %v509 = vpop.f32.mrb[0].mxu0
        %v510 = vadd.f32 %v312, %v509
        %v511 = vpop.f32.mrb[0].mxu0
        %v512 = vadd.f32 %v308, %v511
        %v513 = vpop.f32.mrb[0].mxu0
        %v514 = vadd.f32 %v312, %v513
        %515 = vmatprep.mubr.bf16.mxu0 %v304
        %516 = vmatmul.mubr.bf16.gmra.mrb[0].mxu0 %v303
        %v517 = vpop.f32.mrb[0].mxu0
        %v518 = vadd.f32 %v308, %v517
        %v519 = vpop.f32.mrb[0].mxu0
        %v520 = vadd.f32 %v312, %v519
        %v521 = vpop.f32.mrb[0].mxu0
        %v522 = vadd.f32 %v308, %v521
        %v523 = vpop.f32.mrb[0].mxu0
        %v524 = vadd.f32 %v312, %v523
        %525 = vdwg.mxu0
        %v526 = vmax.f32 %v508, 0.0
        %v527 = vmax.f32 %v510, 0.0
        %v528 = vmax.f32 %v512, 0.0
        %v529 = vmax.f32 %v514, 0.0
        %v530 = vmax.f32 %v518, 0.0
        %v531 = vmax.f32 %v520, 0.0
        %v532 = vmax.f32 %v522, 0.0
        %v533 = vmax.f32 %v524, 0.0
        %v534 = vld [vmem:[#allocation2 + $0x130] sm:$0xf]
        %v535 = vld [vmem:[#allocation2 + $0x138] sm:$0xf]
        %v536 = vld [vmem:[#allocation2 + $0x140] sm:$0xf]
        %v537 = vld [vmem:[#allocation2 + $0x148] sm:$0xf]
        %v538 = vld [vmem:[#allocation2 + $0x150] sm:$0xf]
        %v539 = vld [vmem:[#allocation2 + $0x158] sm:$0xf]
        %v540 = vld [vmem:[#allocation2 + $0x160] sm:$0xf]
        %v541 = vld [vmem:[#allocation2 + $0x168] sm:$0xf]
        %v542 = vld [vmem:[#allocation2 + $0x170] sm:$0xf]
        %v543 = vld [vmem:[#allocation2 + $0x178] sm:$0xf]
        %v544 = vld [vmem:[#allocation2 + $0x180] sm:$0xf]
        %v545 = vld [vmem:[#allocation2 + $0x188] sm:$0xf]
        %v546 = vld [vmem:[#allocation2 + $0x190] sm:$0xf]
        %v547 = vld [vmem:[#allocation2 + $0x198] sm:$0xf]
        %v548 = vld [vmem:[#allocation2 + $0x1a0] sm:$0xf]
        %v549 = vld [vmem:[#allocation2 + $0x1a8] sm:$0xf]
        %v550 = vld [vmem:[#allocation2 + $0x1b0] sm:$0xf]
        %v551 = vld [vmem:[#allocation2 + $0x1b8] sm:$0xf]
        %v552 = vld [vmem:[#allocation2 + $0x1c0] sm:$0xf]
        %v553 = vld [vmem:[#allocation2 + $0x1c8] sm:$0xf]
        %v554 = vld [vmem:[#allocation2 + $0x1d0] sm:$0xf]
        %v555 = vld [vmem:[#allocation2 + $0x1d8] sm:$0xf]
        %v556 = vld [vmem:[#allocation2 + $0x1e0] sm:$0xf]
        %v557 = vld [vmem:[#allocation2 + $0x1e8] sm:$0xf]
        %v558 = vld [vmem:[#allocation2 + $0x1f0] sm:$0xf]
        %v559 = vld [vmem:[#allocation2 + $0x1f8] sm:$0xf]
        %v560 = vld [vmem:[#allocation2 + $0x200] sm:$0xf]
        %v561 = vld [vmem:[#allocation2 + $0x208] sm:$0xf]
        %v562 = vld [vmem:[#allocation2 + $0x210] sm:$0xf]
        %v563 = vld [vmem:[#allocation2 + $0x218] sm:$0xf]
        %v564 = vld [vmem:[#allocation2 + $0x220] sm:$0xf]
        %v565 = vld [vmem:[#allocation2 + $0x228] sm:$0xf]
        %v566 = vld [vmem:[#allocation2 + $0x230] sm:$0x1]
        %v567 = vunpack.c.l.bf16 %v566
        %v568 = vpack.c.bf16 %v528, %v526
        %v569 = vpack.c.bf16 %v529, %v527
        %v570 = vpack.c.bf16 %v532, %v530
        %v571 = vpack.c.bf16 %v533, %v531
        %v572 = vlaneseq
        %v573 = vshrl.u32 %v572, 7
        %v574 = vsub.s32 0, %v573
        %v575 = vrot.slane %v567, %v574
        %v608 = vunpack.c.l.b16 %v534
        %v609 = vunpack.c.l.b16 %v535
        %v610 = vunpack.c.l.b16 %v536
        %v611 = vunpack.c.l.b16 %v537
        %v612 = vunpack.c.l.b16 %v538
        %v613 = vunpack.c.l.b16 %v539
        %v614 = vunpack.c.l.b16 %v540
        %v615 = vunpack.c.l.b16 %v541
        %v616 = vunpack.c.l.b16 %v542
        %v617 = vunpack.c.l.b16 %v543
        %v618 = vunpack.c.l.b16 %v544
        %v619 = vunpack.c.l.b16 %v545
        %v620 = vunpack.c.l.b16 %v546
        %v621 = vunpack.c.l.b16 %v547
        %v622 = vunpack.c.l.b16 %v548
        %v623 = vunpack.c.l.b16 %v549
        %v624 = vunpack.c.l.b16 %v550
        %v625 = vunpack.c.l.b16 %v551
        %v626 = vunpack.c.l.b16 %v552
        %v627 = vunpack.c.l.b16 %v553
        %v628 = vunpack.c.l.b16 %v554
        %v629 = vunpack.c.l.b16 %v555
        %v630 = vunpack.c.l.b16 %v556
        %v631 = vunpack.c.l.b16 %v557
        %v632 = vunpack.c.l.b16 %v558
        %v633 = vunpack.c.l.b16 %v559
        %v634 = vunpack.c.l.b16 %v560
        %v635 = vunpack.c.l.b16 %v561
        %v636 = vunpack.c.l.b16 %v562
        %v637 = vunpack.c.l.b16 %v563
        %v638 = vunpack.c.l.b16 %v564
        %v639 = vunpack.c.l.b16 %v565
        %v640 = vpack.c.b16 %v609, %v608
        %v641 = vpack.c.b16 %v611, %v610
        %v642 = vpack.c.b16 %v613, %v612
        %v643 = vpack.c.b16 %v615, %v614
        %v644 = vpack.c.b16 %v617, %v616
        %v645 = vpack.c.b16 %v619, %v618
        %v646 = vpack.c.b16 %v621, %v620
        %v647 = vpack.c.b16 %v623, %v622
        %v648 = vpack.c.b16 %v625, %v624
        %v649 = vpack.c.b16 %v627, %v626
        %v650 = vpack.c.b16 %v629, %v628
        %v651 = vpack.c.b16 %v631, %v630
        %v652 = vpack.c.b16 %v633, %v632
        %v653 = vpack.c.b16 %v635, %v634
        %v654 = vpack.c.b16 %v637, %v636
        %v655 = vpack.c.b16 %v639, %v638
        %672 = vmatprep.subr.bf16.mxu0 0
        %673 = vmatpush1.bf16.msra.mxu0 %v640
        %674 = vmatprep.subr.bf16.mxu0 0
        %675 = vmatpush1.bf16.msra.mxu0 %v641
        %676 = vmatprep.subr.bf16.mxu0 0
        %677 = vmatpush1.bf16.msra.mxu0 %v642
        %678 = vmatprep.subr.bf16.mxu0 0
        %679 = vmatpush1.bf16.msra.mxu0 %v643
        %680 = vmatprep.subr.bf16.mxu0 0
        %681 = vmatpush1.bf16.msra.mxu0 %v644
        %682 = vmatprep.subr.bf16.mxu0 0
        %683 = vmatpush1.bf16.msra.mxu0 %v645
        %684 = vmatprep.subr.bf16.mxu0 0
        %685 = vmatpush1.bf16.msra.mxu0 %v646
        %686 = vmatprep.subr.bf16.mxu0 0
        %687 = vmatpush1.bf16.msra.mxu0 %v647
        %688 = vmatprep.subr.bf16.mxu0 0
        %689 = vmatpush1.bf16.msra.mxu0 %v648
        %690 = vmatprep.subr.bf16.mxu0 0
        %691 = vmatpush1.bf16.msra.mxu0 %v649
        %692 = vmatprep.subr.bf16.mxu0 0
        %693 = vmatpush1.bf16.msra.mxu0 %v650
        %694 = vmatprep.subr.bf16.mxu0 0
        %695 = vmatpush1.bf16.msra.mxu0 %v651
        %696 = vmatprep.subr.bf16.mxu0 0
        %697 = vmatpush1.bf16.msra.mxu0 %v652
        %698 = vmatprep.subr.bf16.mxu0 0
        %699 = vmatpush1.bf16.msra.mxu0 %v653
        %700 = vmatprep.subr.bf16.mxu0 0
        %701 = vmatpush1.bf16.msra.mxu0 %v654
        %702 = vmatprep.subr.bf16.mxu0 0
        %703 = vmatpush1.bf16.msra.mxu0 %v655
        %704 = vmatprep.mubr.bf16.mxu0 %v569
        %705 = vmatmul.mubr.bf16.gmra.mrb[0].mxu0 %v568
        %v706 = vpop.f32.mrb[0].mxu0
        %v707 = vadd.f32 %v575, %v706
        %v708 = vpop.f32.mrb[0].mxu0
        %v709 = vpop.f32.mrb[0].mxu0
        %v710 = vadd.f32 %v575, %v709
        %v711 = vpop.f32.mrb[0].mxu0
        %712 = vmatprep.mubr.bf16.mxu0 %v571
        %713 = vmatmul.mubr.bf16.gmra.mrb[0].mxu0 %v570
        %v714 = vpop.f32.mrb[0].mxu0
        %v715 = vadd.f32 %v575, %v714
        %v716 = vpop.f32.mrb[0].mxu0
        %v717 = vpop.f32.mrb[0].mxu0
        %v718 = vadd.f32 %v575, %v717
        %v719 = vpop.f32.mrb[0].mxu0
        %720 = vdwg.mxu0
        %v721 = vtanh.pop %v707
        %v722 = vtanh.pop %v710
        %v723 = vtanh.pop %v715
        %v724 = vtanh.pop %v718
        %v725 = vpack.c.bf16 %v722, %v721
        %v726 = vpack.c.bf16 %v724, %v723
        %v729 = vunpack.c.l.b16 %v725
        %v730 = vunpack.c.h.b16 %v725
        %v731 = vunpack.c.l.b16 %v726
        %v732 = vunpack.c.h.b16 %v726
        %v733 = vpack.c.b16 %v729, %v729
        %v734 = vpack.c.b16 %v730, %v730
        %v735 = vpack.c.b16 %v731, %v731
        %v736 = vpack.c.b16 %v732, %v732
        %741 = vst [vmem:[%s152] sm:$0xf] %v733
        %742 = vst [vmem:[%s152 + $0x4] sm:$0xf] %v734
        %743 = vst [vmem:[%s152 + $0x8] sm:$0xf] %v735
        %744 = vst [vmem:[%s152 + $0xc] sm:$0xf] %v736
        %s745 = sand.u32 %s72, 1
        %s746 = scalar_lea.sflag [#allocation4], %s745
        %s747 = sand.u32 %s72, 1
        %s748 = smul.addr %s747, 16
        %s749 = scalar_lea.vmem [#allocation5], %s748
        // Predicated region
        $region33: #{tpu_custom_call.1} parent=27 // pred_check
          %p750 = pneg %p82
        $region34: #{tpu_custom_call.1} parent=27 // pred_check_branch
          %752 = sbr.rel (%p750) target = $region36
        $region35: #{tpu_custom_call.1} parent=27 // pred_region
          %s753 = smul.u32 4, %s17
          %s755 = ssub.s32 256, 256
          %756 = vsyncadd %s746, %s755
          %s757 = smul.addr %s753, 64
          %s758 = scalar_lea.hbm %s2, %s757
          %s759 = sshll.u32 %s749, 4
          %s760 = int_to_ptr.vmem [resolvable:$true] %s759
          %765 = dma.vmem_to_hbm [thread:$0]  %s760, 256, %s758, %s746, 64, 64, 4
        $region36: #{tpu_custom_call.1} parent=27 // pred_fallthru
          _
      $region28: #{tpu_custom_call.1} parent=5 // pred_fallthru
        _
      %p766 = scmp.le.s32.totalorder 2, %s12
      // Predicated region
      $region37: #{tpu_custom_call.1} parent=5 // pred_check
        %p767 = pneg %p766
      $region38: #{tpu_custom_call.1} parent=5 // pred_check_branch
        %769 = sbr.rel (%p767) target = $region40
      $region39: #{tpu_custom_call.1} parent=5 // pred_region
        %s770 = ssub.s32 %s12, 2
        // Predicated region
        $region41: #{tpu_custom_call.1} parent=39 // pred_check
          %p771 = pneg %p88
        $region42: #{tpu_custom_call.1} parent=39 // pred_check_branch
          %773 = sbr.rel (%p771) target = $region44
        $region43: #{tpu_custom_call.1} parent=39 // pred_region
          %s774 = sand.u32 %s73, 1
          %s775 = scalar_lea.sflag [#allocation4], %s774
          %s776 = sand.u32 %s73, 1
          %s777 = smul.addr %s776, 16
          %s778 = scalar_lea.vmem [#allocation5], %s777
          %779 = dma.done %s775, 256
        $region44: #{tpu_custom_call.1} parent=39 // pred_fallthru
          _
      $region40: #{tpu_custom_call.1} parent=5 // pred_fallthru
        _
    $region6: #{tpu_custom_call.1} parent=1 // loop_footer
      %s16 = sadd.s32 1, %s12
    $region7: #{tpu_custom_call.1} parent=1 // loop_footer_branch
      %11 = sbr.rel target = $region3
    $region8: #{tpu_custom_call.1} parent=1 // loop_exit
      _
    %780 = vsyncpa [#allocation3], 1
    %s781 = scalar_lea.sflag [#allocation3], 1
    %782 = vsyncpa %s781, 1
    %783 = vsyncpa [#allocation4], 1
    %s784 = scalar_lea.sflag [#allocation4], 1
    %785 = vsyncpa %s784, 1

</llo_original>
